<compile_context>
chip_gen: v5e
topology: v5e:2x2
jax: 0.10.0
libtpu: 0.0.40
codegen_flags: <defaults>
</compile_context>

<pallas_src>
import functools

import jax
import jax.numpy as jnp
from jax.experimental import pallas as pl
from jax.experimental.pallas import tpu as pltpu


def _sigmoid(x):
    # Logistic via tanh: one EUP op + one VPU fma, avoids a possible
    # exp -> reciprocal double round-trip through the EUP FIFO on the
    # serial gate chain.
    return 0.5 * jnp.tanh(0.5 * x) + 0.5


def _mxu_dot(x, w):
    # Cast the activation to the weight dtype (bf16 on v6e/v7x for the native
    # single-pass MXU path, f32 otherwise); always accumulate in f32.
    return jnp.dot(x.astype(w.dtype), w, preferred_element_type=jnp.float32)


def _lstm_dueling_kernel(
    # inputs
    x_ref,           # (B, D)        f32
    h0_ref,          # (L, B, H)     f32
    c0_ref,          # (L, B, H)     f32
    wih0_ref,        # (D, 4H)       layer-0 input weights, transposed, [i,f,o,g]
    wih_rest_ref,    # (L-1, H, 4H)  layers 1..L-1 input weights, transposed
    whh_ref,         # (L, H, 4H)    recurrent weights, transposed
    b_ref,           # (L, 1, 4H)    combined bias b_ih + b_hh, f32
    fc1w_ref,        # (H, 32)
    fc1b_ref,        # (1, 32)
    fc2w_ref,        # (32, 32)
    fc2b_ref,        # (1, 32)
    headw_ref,       # (32, 1+A)     [fc_value | fc_action_adv] fused
    headb_ref,       # (1, 1+A)
    # outputs
    q_ref,           # (B, A)
    hout_ref,        # (L, B, H)
    cout_ref,        # (L, B, H)
    *, n_layers, hidden_dim,
):
    H = hidden_dim
    x = x_ref[...]

    # ---------------------------------------------------------------------
    # Hoisted work, independent of the serial layer chain (single timestep
    # => h_prev of layer l is h0[l], NOT the previous layer's output):
    # all L recurrent matmuls with the bias folded in, plus the layer-0
    # input matmul.  These L+1 dots pipeline on the MXU.
    # ---------------------------------------------------------------------
    rec = [_mxu_dot(h0_ref[l], whh_ref[l]) + b_ref[l] for l in range(n_layers)]
    gates0 = _mxu_dot(x, wih0_ref[...]) + rec[0]

    # Serial chain: one matmul + one sigmoid + two tanh per layer.
    inp = None
    for l in range(n_layers):
        if l == 0:
            gates = gates0                                   # (B, 4H)
        else:
            gates = _mxu_dot(inp, wih_rest_ref[l - 1]) + rec[l]

        # Gate order repacked to [i, f, o, g]: one wide sigmoid, one tanh.
        sig = _sigmoid(gates[:, :3 * H])
        g_g = jnp.tanh(gates[:, 3 * H:4 * H])
        i_g = sig[:, 0 * H:1 * H]
        f_g = sig[:, 1 * H:2 * H]
        o_g = sig[:, 2 * H:3 * H]

        c_new = f_g * c0_ref[l] + i_g * g_g
        h_new = o_g * jnp.tanh(c_new)

        hout_ref[l, :, :] = h_new.astype(hout_ref.dtype)
        cout_ref[l, :, :] = c_new.astype(cout_ref.dtype)
        inp = h_new                                          # feed next layer

    # --- dueling MLP head (V and A fused into one matmul) ---
    x1 = jnp.maximum(_mxu_dot(inp, fc1w_ref[...]) + fc1b_ref[...], 0.0)
    x2 = jnp.maximum(_mxu_dot(x1, fc2w_ref[...]) + fc2b_ref[...], 0.0)
    va = _mxu_dot(x2, headw_ref[...]) + headb_ref[...]       # (B, 1 + A)
    v = va[:, :1]
    a = va[:, 1:]
    # dueling_type == 'mean': a.mean() is a global scalar mean (matches torch)
    q = v + a - jnp.mean(a)
    q_ref[...] = q.astype(q_ref.dtype)


def lstm_dueling_forward(x, prev_state, packed, *, n_layers, hidden_dim):
    """x: (B, input_dim) f32; prev_state: (h, c) each (L, B, H) f32."""
    B, _ = x.shape
    L, _, H = prev_state[0].shape
    assert L == n_layers and H == hidden_dim
    A = packed["head_w_t"].shape[1] - 1

    kernel = functools.partial(
        _lstm_dueling_kernel, n_layers=n_layers, hidden_dim=hidden_dim)

    # Tiny footprint (a few KB): everything lives in VMEM, no grid.  If the
    # batch ever grows to hundreds of rows, add a 1-D "parallel" grid over B
    # (block multiple of 8) to engage the second TensorCore on v7x.
    vmem = pl.BlockSpec(memory_space=pltpu.MemorySpace.VMEM)
    inputs = (
        x, prev_state[0], prev_state[1],
        packed["wih0_t"], packed["wih_rest_t"], packed["whh_t"], packed["b"],
        packed["fc1_w_t"], packed["fc1_b"],
        packed["fc2_w_t"], packed["fc2_b"],
        packed["head_w_t"], packed["head_b"],
    )

    q, h_out, c_out = pl.pallas_call(
        kernel,
        out_shape=(
            jax.ShapeDtypeStruct((B, A), jnp.float32),
            jax.ShapeDtypeStruct((L, B, H), jnp.float32),
            jax.ShapeDtypeStruct((L, B, H), jnp.float32),
        ),
        in_specs=[vmem] * len(inputs),
        out_specs=(vmem, vmem, vmem),
    )(*inputs)
    return q, (h_out, c_out)


# ---------------------------------------------------------------------------
# Parameter generation (PyTorch layout) and repacking for the kernel.
# ---------------------------------------------------------------------------
def init_torch_params(key, input_dim, output_dim, hidden_dim, n_layers):
    """Synthetic parameters in PyTorch layout (gate order [i, f, g, o])."""
    H = hidden_dim
    bound = 1.0 / jnp.sqrt(jnp.float32(H))

    def u(k, shape):
        return jax.random.uniform(k, shape, jnp.float32, -bound, bound)

    keys = iter(jax.random.split(key, 4 * n_layers + 8))
    p = {}
    for l in range(n_layers):
        in_dim = input_dim if l == 0 else H
        p[f"w_ih_{l}"] = u(next(keys), (4 * H, in_dim))   # (4H, in)
        p[f"w_hh_{l}"] = u(next(keys), (4 * H, H))        # (4H, H)
        p[f"b_ih_{l}"] = u(next(keys), (4 * H,))
        p[f"b_hh_{l}"] = u(next(keys), (4 * H,))
    p["fc1_w"] = u(next(keys), (32, H));          p["fc1_b"] = u(next(keys), (32,))
    p["fc2_w"] = u(next(keys), (32, 32));         p["fc2_b"] = u(next(keys), (32,))
    p["fcv_w"] = u(next(keys), (1, 32));          p["fcv_b"] = u(next(keys), (1,))
    p["fca_w"] = u(next(keys), (output_dim, 32)); p["fca_b"] = u(next(keys), (output_dim,))
    return p


def pack_params(tp, n_layers, hidden_dim, matmul_dtype=jnp.float32):
    """Repack PyTorch-layout params for the kernel:
       - transpose weights to (in, out)
       - reorder LSTM gates [i,f,g,o] -> [i,f,o,g] (sigmoid gates contiguous)
       - fold b_ih + b_hh
       - fuse the V / A heads into one (32, 1+A) weight
       - optionally cast matmul weights to bf16 (v6e/v7x fast MXU path)."""
    H = hidden_dim
    assert n_layers >= 2

    def reorder(m):  # along axis 0 (the 4H axis), works for 1-D and 2-D
        return jnp.concatenate(
            [m[0:H], m[H:2 * H], m[3 * H:4 * H], m[2 * H:3 * H]], axis=0)

    wih_t, whh_t, bias = [], [], []
    for l in range(n_layers):
        wih_t.append(reorder(tp[f"w_ih_{l}"]).T.astype(matmul_dtype))   # (in, 4H)
        whh_t.append(reorder(tp[f"w_hh_{l}"]).T.astype(matmul_dtype))   # (H, 4H)
        bias.append(reorder(tp[f"b_ih_{l}"] + tp[f"b_hh_{l}"]).reshape(1, 4 * H))

    return {
        "wih0_t": wih_t[0],                               # (D, 4H)
        "wih_rest_t": jnp.stack(wih_t[1:], axis=0),       # (L-1, H, 4H)
        "whh_t": jnp.stack(whh_t, axis=0),                # (L, H, 4H)
        "b": jnp.stack(bias, axis=0),                     # (L, 1, 4H)  f32
        "fc1_w_t": tp["fc1_w"].T.astype(matmul_dtype),    # (H, 32)
        "fc1_b": tp["fc1_b"].reshape(1, -1),
        "fc2_w_t": tp["fc2_w"].T.astype(matmul_dtype),    # (32, 32)
        "fc2_b": tp["fc2_b"].reshape(1, -1),
        "head_w_t": jnp.concatenate(
            [tp["fcv_w"].T, tp["fca_w"].T], axis=1).astype(matmul_dtype),  # (32, 1+A)
        "head_b": jnp.concatenate(
            [tp["fcv_b"], tp["fca_b"]]).reshape(1, -1),   # (1, 1+A)
    }


def reference_forward(x, prev_state, tp, *, n_layers, hidden_dim):
    """Pure-JAX reference mirroring the PyTorch module exactly
       (PyTorch layout, gate order [i, f, g, o])."""
    H = hidden_dim
    h0, c0 = prev_state
    inp = x
    h_out, c_out = [], []
    for l in range(n_layers):
        gates = (inp @ tp[f"w_ih_{l}"].T + h0[l] @ tp[f"w_hh_{l}"].T
                 + tp[f"b_ih_{l}"] + tp[f"b_hh_{l}"])
        i_g = jax.nn.sigmoid(gates[:, 0 * H:1 * H])
        f_g = jax.nn.sigmoid(gates[:, 1 * H:2 * H])
        g_g = jnp.tanh(gates[:, 2 * H:3 * H])
        o_g = jax.nn.sigmoid(gates[:, 3 * H:4 * H])
        c = f_g * c0[l] + i_g * g_g
        h = o_g * jnp.tanh(c)
        h_out.append(h)
        c_out.append(c)
        inp = h
    x1 = jax.nn.relu(inp @ tp["fc1_w"].T + tp["fc1_b"])
    x2 = jax.nn.relu(x1 @ tp["fc2_w"].T + tp["fc2_b"])
    v = x2 @ tp["fcv_w"].T + tp["fcv_b"]
    a = x2 @ tp["fca_w"].T + tp["fca_b"]
    q = v + a - jnp.mean(a)
    return q, (jnp.stack(h_out), jnp.stack(c_out))


if __name__ == "__main__":
    # Shapes consistent with the module defaults.
    batch = 2
    input_dim = 16
    output_dim = 4
    hidden_dim = 20
    n_layers = 4

    key = jax.random.PRNGKey(0)
    k_param, k_x, k_h, k_c = jax.random.split(key, 4)

    tp = init_torch_params(k_param, input_dim, output_dim, hidden_dim, n_layers)
    x = jax.random.normal(k_x, (batch, input_dim), jnp.float32)
    h0 = jax.random.normal(k_h, (n_layers, batch, hidden_dim), jnp.float32) * 0.1
    c0 = jax.random.normal(k_c, (n_layers, batch, hidden_dim), jnp.float32) * 0.1

    q_ref, (h_ref, c_ref) = reference_forward(
        x, (h0, c0), tp, n_layers=n_layers, hidden_dim=hidden_dim)

    # --- f32 matmul path: exact parity with the PyTorch math ---
    packed_f32 = pack_params(tp, n_layers, hidden_dim, matmul_dtype=jnp.float32)
    q, (h_new, c_new) = lstm_dueling_forward(
        x, (h0, c0), packed_f32, n_layers=n_layers, hidden_dim=hidden_dim)
    jax.block_until_ready((q, h_new, c_new))
    assert jnp.allclose(q, q_ref, rtol=1e-4, atol=1e-5)
    assert jnp.allclose(h_new, h_ref, rtol=1e-4, atol=1e-5)
    assert jnp.allclose(c_new, c_ref, rtol=1e-4, atol=1e-5)

    # --- bf16 matmul-input path (single-pass MXU on v6e/v7x); gate/elementwise
    #     math stays f32, so only the matmul inputs lose precision ---
    packed_bf16 = pack_params(tp, n_layers, hidden_dim, matmul_dtype=jnp.bfloat16)
    q_b, (h_b, c_b) = lstm_dueling_forward(
        x, (h0, c0), packed_bf16, n_layers=n_layers, hidden_dim=hidden_dim)
    jax.block_until_ready((q_b, h_b, c_b))
    assert jnp.allclose(q_b, q_ref, rtol=5e-2, atol=5e-2)
    assert jnp.allclose(h_b, h_ref, rtol=5e-2, atol=5e-2)
    assert jnp.allclose(c_b, c_ref, rtol=5e-2, atol=5e-2)

    print("KERNEL_OK")
</pallas_src>

<mosaic_0001>
module attributes {stable_mosaic.version = 11 : i64} {
  func.func @_lstm_dueling_kernel(%arg0: memref<2x16xf32, #tpu.memory_space<vmem>>, %arg1: memref<4x2x20xf32, #tpu.memory_space<vmem>>, %arg2: memref<4x2x20xf32, #tpu.memory_space<vmem>>, %arg3: memref<16x80xf32, #tpu.memory_space<vmem>>, %arg4: memref<3x20x80xf32, #tpu.memory_space<vmem>>, %arg5: memref<4x20x80xf32, #tpu.memory_space<vmem>>, %arg6: memref<4x1x80xf32, #tpu.memory_space<vmem>>, %arg7: memref<20x32xf32, #tpu.memory_space<vmem>>, %arg8: memref<1x32xf32, #tpu.memory_space<vmem>>, %arg9: memref<32x32xf32, #tpu.memory_space<vmem>>, %arg10: memref<1x32xf32, #tpu.memory_space<vmem>>, %arg11: memref<32x5xf32, #tpu.memory_space<vmem>>, %arg12: memref<1x5xf32, #tpu.memory_space<vmem>>, %arg13: memref<2x4xf32, #tpu.memory_space<vmem>>, %arg14: memref<4x2x20xf32, #tpu.memory_space<vmem>>, %arg15: memref<4x2x20xf32, #tpu.memory_space<vmem>>) attributes {dimension_semantics = [], scalar_prefetch = 0 : i64, scratch_operands = 0 : i64, tpu.core_type = #tpu.core_type<tc>} {
    %c0 = arith.constant 0 : index
    %c0_0 = arith.constant 0 : index
    %0 = vector.load %arg0[%c0, %c0_0] : memref<2x16xf32, #tpu.memory_space<vmem>>, vector<2x16xf32>
    %c0_1 = arith.constant 0 : index
    %c0_2 = arith.constant 0 : index
    %c0_3 = arith.constant 0 : index
    %1 = vector.load %arg1[%c0_1, %c0_2, %c0_3] : memref<4x2x20xf32, #tpu.memory_space<vmem>>, vector<1x2x20xf32>
    %2 = vector.shape_cast %1 : vector<1x2x20xf32> to vector<2x20xf32>
    %c0_4 = arith.constant 0 : index
    %c0_5 = arith.constant 0 : index
    %c0_6 = arith.constant 0 : index
    %3 = vector.load %arg5[%c0_4, %c0_5, %c0_6] : memref<4x20x80xf32, #tpu.memory_space<vmem>>, vector<1x20x80xf32>
    %4 = vector.shape_cast %3 : vector<1x20x80xf32> to vector<20x80xf32>
    %cst = arith.constant dense<0.000000e+00> : vector<2x80xf32>
    %5 = tpu.matmul %2, %4, %cst {dimension_numbers = #tpu.dot_dimension_numbers<[1], [0], [0], [1], [0, 0, 1, 1], [], []>} : vector<2x20xf32>, vector<20x80xf32>, vector<2x80xf32> -> vector<2x80xf32>
    %c0_7 = arith.constant 0 : index
    %c0_8 = arith.constant 0 : index
    %c0_9 = arith.constant 0 : index
    %6 = vector.load %arg6[%c0_7, %c0_8, %c0_9] : memref<4x1x80xf32, #tpu.memory_space<vmem>>, vector<1x1x80xf32>
    %7 = vector.shape_cast %6 : vector<1x1x80xf32> to vector<1x80xf32>
    %8 = vector.broadcast %7 : vector<1x80xf32> to vector<2x80xf32>
    %9 = arith.addf %5, %8 : vector<2x80xf32>
    %c1 = arith.constant 1 : index
    %c0_10 = arith.constant 0 : index
    %c0_11 = arith.constant 0 : index
    %10 = vector.load %arg1[%c1, %c0_10, %c0_11] : memref<4x2x20xf32, #tpu.memory_space<vmem>>, vector<1x2x20xf32>
    %11 = vector.shape_cast %10 : vector<1x2x20xf32> to vector<2x20xf32>
    %c1_12 = arith.constant 1 : index
    %c0_13 = arith.constant 0 : index
    %c0_14 = arith.constant 0 : index
    %12 = vector.load %arg5[%c1_12, %c0_13, %c0_14] : memref<4x20x80xf32, #tpu.memory_space<vmem>>, vector<1x20x80xf32>
    %13 = vector.shape_cast %12 : vector<1x20x80xf32> to vector<20x80xf32>
    %cst_15 = arith.constant dense<0.000000e+00> : vector<2x80xf32>
    %14 = tpu.matmul %11, %13, %cst_15 {dimension_numbers = #tpu.dot_dimension_numbers<[1], [0], [0], [1], [0, 0, 1, 1], [], []>} : vector<2x20xf32>, vector<20x80xf32>, vector<2x80xf32> -> vector<2x80xf32>
    %c1_16 = arith.constant 1 : index
    %c0_17 = arith.constant 0 : index
    %c0_18 = arith.constant 0 : index
    %15 = vector.load %arg6[%c1_16, %c0_17, %c0_18] : memref<4x1x80xf32, #tpu.memory_space<vmem>>, vector<1x1x80xf32>
    %16 = vector.shape_cast %15 : vector<1x1x80xf32> to vector<1x80xf32>
    %17 = vector.broadcast %16 : vector<1x80xf32> to vector<2x80xf32>
    %18 = arith.addf %14, %17 : vector<2x80xf32>
    %c2 = arith.constant 2 : index
    %c0_19 = arith.constant 0 : index
    %c0_20 = arith.constant 0 : index
    %19 = vector.load %arg1[%c2, %c0_19, %c0_20] : memref<4x2x20xf32, #tpu.memory_space<vmem>>, vector<1x2x20xf32>
    %20 = vector.shape_cast %19 : vector<1x2x20xf32> to vector<2x20xf32>
    %c2_21 = arith.constant 2 : index
    %c0_22 = arith.constant 0 : index
    %c0_23 = arith.constant 0 : index
    %21 = vector.load %arg5[%c2_21, %c0_22, %c0_23] : memref<4x20x80xf32, #tpu.memory_space<vmem>>, vector<1x20x80xf32>
    %22 = vector.shape_cast %21 : vector<1x20x80xf32> to vector<20x80xf32>
    %cst_24 = arith.constant dense<0.000000e+00> : vector<2x80xf32>
    %23 = tpu.matmul %20, %22, %cst_24 {dimension_numbers = #tpu.dot_dimension_numbers<[1], [0], [0], [1], [0, 0, 1, 1], [], []>} : vector<2x20xf32>, vector<20x80xf32>, vector<2x80xf32> -> vector<2x80xf32>
    %c2_25 = arith.constant 2 : index
    %c0_26 = arith.constant 0 : index
    %c0_27 = arith.constant 0 : index
    %24 = vector.load %arg6[%c2_25, %c0_26, %c0_27] : memref<4x1x80xf32, #tpu.memory_space<vmem>>, vector<1x1x80xf32>
    %25 = vector.shape_cast %24 : vector<1x1x80xf32> to vector<1x80xf32>
    %26 = vector.broadcast %25 : vector<1x80xf32> to vector<2x80xf32>
    %27 = arith.addf %23, %26 : vector<2x80xf32>
    %c3 = arith.constant 3 : index
    %c0_28 = arith.constant 0 : index
    %c0_29 = arith.constant 0 : index
    %28 = vector.load %arg1[%c3, %c0_28, %c0_29] : memref<4x2x20xf32, #tpu.memory_space<vmem>>, vector<1x2x20xf32>
    %29 = vector.shape_cast %28 : vector<1x2x20xf32> to vector<2x20xf32>
    %c3_30 = arith.constant 3 : index
    %c0_31 = arith.constant 0 : index
    %c0_32 = arith.constant 0 : index
    %30 = vector.load %arg5[%c3_30, %c0_31, %c0_32] : memref<4x20x80xf32, #tpu.memory_space<vmem>>, vector<1x20x80xf32>
    %31 = vector.shape_cast %30 : vector<1x20x80xf32> to vector<20x80xf32>
    %cst_33 = arith.constant dense<0.000000e+00> : vector<2x80xf32>
    %32 = tpu.matmul %29, %31, %cst_33 {dimension_numbers = #tpu.dot_dimension_numbers<[1], [0], [0], [1], [0, 0, 1, 1], [], []>} : vector<2x20xf32>, vector<20x80xf32>, vector<2x80xf32> -> vector<2x80xf32>
    %c3_34 = arith.constant 3 : index
    %c0_35 = arith.constant 0 : index
    %c0_36 = arith.constant 0 : index
    %33 = vector.load %arg6[%c3_34, %c0_35, %c0_36] : memref<4x1x80xf32, #tpu.memory_space<vmem>>, vector<1x1x80xf32>
    %34 = vector.shape_cast %33 : vector<1x1x80xf32> to vector<1x80xf32>
    %35 = vector.broadcast %34 : vector<1x80xf32> to vector<2x80xf32>
    %36 = arith.addf %32, %35 : vector<2x80xf32>
    %c0_37 = arith.constant 0 : index
    %c0_38 = arith.constant 0 : index
    %37 = vector.load %arg3[%c0_37, %c0_38] : memref<16x80xf32, #tpu.memory_space<vmem>>, vector<16x80xf32>
    %cst_39 = arith.constant dense<0.000000e+00> : vector<2x80xf32>
    %38 = tpu.matmul %0, %37, %cst_39 {dimension_numbers = #tpu.dot_dimension_numbers<[1], [0], [0], [1], [0, 0, 1, 1], [], []>} : vector<2x16xf32>, vector<16x80xf32>, vector<2x80xf32> -> vector<2x80xf32>
    %39 = arith.addf %38, %9 : vector<2x80xf32>
    %40 = vector.extract_strided_slice %39 {offsets = [0, 0], sizes = [2, 60], strides = [1, 1]} : vector<2x80xf32> to vector<2x60xf32>
    %cst_40 = arith.constant 5.000000e-01 : f32
    %41 = vector.broadcast %cst_40 : f32 to vector<2x60xf32>
    %42 = arith.mulf %41, %40 : vector<2x60xf32>
    %43 = math.tanh %42 : vector<2x60xf32>
    %cst_41 = arith.constant 5.000000e-01 : f32
    %44 = vector.broadcast %cst_41 : f32 to vector<2x60xf32>
    %45 = arith.mulf %44, %43 : vector<2x60xf32>
    %cst_42 = arith.constant 5.000000e-01 : f32
    %46 = vector.broadcast %cst_42 : f32 to vector<2x60xf32>
    %47 = arith.addf %45, %46 : vector<2x60xf32>
    %48 = vector.extract_strided_slice %39 {offsets = [0, 60], sizes = [2, 20], strides = [1, 1]} : vector<2x80xf32> to vector<2x20xf32>
    %49 = math.tanh %48 : vector<2x20xf32>
    %50 = vector.extract_strided_slice %47 {offsets = [0, 0], sizes = [2, 20], strides = [1, 1]} : vector<2x60xf32> to vector<2x20xf32>
    %51 = vector.extract_strided_slice %47 {offsets = [0, 20], sizes = [2, 20], strides = [1, 1]} : vector<2x60xf32> to vector<2x20xf32>
    %52 = vector.extract_strided_slice %47 {offsets = [0, 40], sizes = [2, 20], strides = [1, 1]} : vector<2x60xf32> to vector<2x20xf32>
    %c0_43 = arith.constant 0 : index
    %c0_44 = arith.constant 0 : index
    %c0_45 = arith.constant 0 : index
    %53 = vector.load %arg2[%c0_43, %c0_44, %c0_45] : memref<4x2x20xf32, #tpu.memory_space<vmem>>, vector<1x2x20xf32>
    %54 = vector.shape_cast %53 : vector<1x2x20xf32> to vector<2x20xf32>
    %55 = arith.mulf %51, %54 : vector<2x20xf32>
    %56 = arith.mulf %50, %49 : vector<2x20xf32>
    %57 = arith.addf %55, %56 : vector<2x20xf32>
    %58 = math.tanh %57 : vector<2x20xf32>
    %59 = arith.mulf %52, %58 : vector<2x20xf32>
    %c0_46 = arith.constant 0 : index
    %c0_47 = arith.constant 0 : index
    %c0_48 = arith.constant 0 : index
    %60 = vector.load %arg14[%c0_46, %c0_47, %c0_48] : memref<4x2x20xf32, #tpu.memory_space<vmem>>, vector<1x2x20xf32>
    %61 = vector.shape_cast %60 : vector<1x2x20xf32> to vector<2x20xf32>
    %62 = vector.shape_cast %59 : vector<2x20xf32> to vector<1x2x20xf32>
    tpu.vector_store %arg14[%c0_46, %c0_47, %c0_48], %62 {strides = array<i32>} : memref<4x2x20xf32, #tpu.memory_space<vmem>>, vector<1x2x20xf32>,
    %c0_49 = arith.constant 0 : index
    %c0_50 = arith.constant 0 : index
    %c0_51 = arith.constant 0 : index
    %63 = vector.load %arg15[%c0_49, %c0_50, %c0_51] : memref<4x2x20xf32, #tpu.memory_space<vmem>>, vector<1x2x20xf32>
    %64 = vector.shape_cast %63 : vector<1x2x20xf32> to vector<2x20xf32>
    %65 = vector.shape_cast %57 : vector<2x20xf32> to vector<1x2x20xf32>
    tpu.vector_store %arg15[%c0_49, %c0_50, %c0_51], %65 {strides = array<i32>} : memref<4x2x20xf32, #tpu.memory_space<vmem>>, vector<1x2x20xf32>,
    %c0_52 = arith.constant 0 : index
    %c0_53 = arith.constant 0 : index
    %c0_54 = arith.constant 0 : index
    %66 = vector.load %arg4[%c0_52, %c0_53, %c0_54] : memref<3x20x80xf32, #tpu.memory_space<vmem>>, vector<1x20x80xf32>
    %67 = vector.shape_cast %66 : vector<1x20x80xf32> to vector<20x80xf32>
    %cst_55 = arith.constant dense<0.000000e+00> : vector<2x80xf32>
    %68 = tpu.matmul %59, %67, %cst_55 {dimension_numbers = #tpu.dot_dimension_numbers<[1], [0], [0], [1], [0, 0, 1, 1], [], []>} : vector<2x20xf32>, vector<20x80xf32>, vector<2x80xf32> -> vector<2x80xf32>
    %69 = arith.addf %68, %18 : vector<2x80xf32>
    %70 = vector.extract_strided_slice %69 {offsets = [0, 0], sizes = [2, 60], strides = [1, 1]} : vector<2x80xf32> to vector<2x60xf32>
    %cst_56 = arith.constant 5.000000e-01 : f32
    %71 = vector.broadcast %cst_56 : f32 to vector<2x60xf32>
    %72 = arith.mulf %71, %70 : vector<2x60xf32>
    %73 = math.tanh %72 : vector<2x60xf32>
    %cst_57 = arith.constant 5.000000e-01 : f32
    %74 = vector.broadcast %cst_57 : f32 to vector<2x60xf32>
    %75 = arith.mulf %74, %73 : vector<2x60xf32>
    %cst_58 = arith.constant 5.000000e-01 : f32
    %76 = vector.broadcast %cst_58 : f32 to vector<2x60xf32>
    %77 = arith.addf %75, %76 : vector<2x60xf32>
    %78 = vector.extract_strided_slice %69 {offsets = [0, 60], sizes = [2, 20], strides = [1, 1]} : vector<2x80xf32> to vector<2x20xf32>
    %79 = math.tanh %78 : vector<2x20xf32>
    %80 = vector.extract_strided_slice %77 {offsets = [0, 0], sizes = [2, 20], strides = [1, 1]} : vector<2x60xf32> to vector<2x20xf32>
    %81 = vector.extract_strided_slice %77 {offsets = [0, 20], sizes = [2, 20], strides = [1, 1]} : vector<2x60xf32> to vector<2x20xf32>
    %82 = vector.extract_strided_slice %77 {offsets = [0, 40], sizes = [2, 20], strides = [1, 1]} : vector<2x60xf32> to vector<2x20xf32>
    %c1_59 = arith.constant 1 : index
    %c0_60 = arith.constant 0 : index
    %c0_61 = arith.constant 0 : index
    %83 = vector.load %arg2[%c1_59, %c0_60, %c0_61] : memref<4x2x20xf32, #tpu.memory_space<vmem>>, vector<1x2x20xf32>
    %84 = vector.shape_cast %83 : vector<1x2x20xf32> to vector<2x20xf32>
    %85 = arith.mulf %81, %84 : vector<2x20xf32>
    %86 = arith.mulf %80, %79 : vector<2x20xf32>
    %87 = arith.addf %85, %86 : vector<2x20xf32>
    %88 = math.tanh %87 : vector<2x20xf32>
    %89 = arith.mulf %82, %88 : vector<2x20xf32>
    %c1_62 = arith.constant 1 : index
    %c0_63 = arith.constant 0 : index
    %c0_64 = arith.constant 0 : index
    %90 = vector.load %arg14[%c1_62, %c0_63, %c0_64] : memref<4x2x20xf32, #tpu.memory_space<vmem>>, vector<1x2x20xf32>
    %91 = vector.shape_cast %90 : vector<1x2x20xf32> to vector<2x20xf32>
    %92 = vector.shape_cast %89 : vector<2x20xf32> to vector<1x2x20xf32>
    tpu.vector_store %arg14[%c1_62, %c0_63, %c0_64], %92 {strides = array<i32>} : memref<4x2x20xf32, #tpu.memory_space<vmem>>, vector<1x2x20xf32>,
    %c1_65 = arith.constant 1 : index
    %c0_66 = arith.constant 0 : index
    %c0_67 = arith.constant 0 : index
    %93 = vector.load %arg15[%c1_65, %c0_66, %c0_67] : memref<4x2x20xf32, #tpu.memory_space<vmem>>, vector<1x2x20xf32>
    %94 = vector.shape_cast %93 : vector<1x2x20xf32> to vector<2x20xf32>
    %95 = vector.shape_cast %87 : vector<2x20xf32> to vector<1x2x20xf32>
    tpu.vector_store %arg15[%c1_65, %c0_66, %c0_67], %95 {strides = array<i32>} : memref<4x2x20xf32, #tpu.memory_space<vmem>>, vector<1x2x20xf32>,
    %c1_68 = arith.constant 1 : index
    %c0_69 = arith.constant 0 : index
    %c0_70 = arith.constant 0 : index
    %96 = vector.load %arg4[%c1_68, %c0_69, %c0_70] : memref<3x20x80xf32, #tpu.memory_space<vmem>>, vector<1x20x80xf32>
    %97 = vector.shape_cast %96 : vector<1x20x80xf32> to vector<20x80xf32>
    %cst_71 = arith.constant dense<0.000000e+00> : vector<2x80xf32>
    %98 = tpu.matmul %89, %97, %cst_71 {dimension_numbers = #tpu.dot_dimension_numbers<[1], [0], [0], [1], [0, 0, 1, 1], [], []>} : vector<2x20xf32>, vector<20x80xf32>, vector<2x80xf32> -> vector<2x80xf32>
    %99 = arith.addf %98, %27 : vector<2x80xf32>
    %100 = vector.extract_strided_slice %99 {offsets = [0, 0], sizes = [2, 60], strides = [1, 1]} : vector<2x80xf32> to vector<2x60xf32>
    %cst_72 = arith.constant 5.000000e-01 : f32
    %101 = vector.broadcast %cst_72 : f32 to vector<2x60xf32>
    %102 = arith.mulf %101, %100 : vector<2x60xf32>
    %103 = math.tanh %102 : vector<2x60xf32>
    %cst_73 = arith.constant 5.000000e-01 : f32
    %104 = vector.broadcast %cst_73 : f32 to vector<2x60xf32>
    %105 = arith.mulf %104, %103 : vector<2x60xf32>
    %cst_74 = arith.constant 5.000000e-01 : f32
    %106 = vector.broadcast %cst_74 : f32 to vector<2x60xf32>
    %107 = arith.addf %105, %106 : vector<2x60xf32>
    %108 = vector.extract_strided_slice %99 {offsets = [0, 60], sizes = [2, 20], strides = [1, 1]} : vector<2x80xf32> to vector<2x20xf32>
    %109 = math.tanh %108 : vector<2x20xf32>
    %110 = vector.extract_strided_slice %107 {offsets = [0, 0], sizes = [2, 20], strides = [1, 1]} : vector<2x60xf32> to vector<2x20xf32>
    %111 = vector.extract_strided_slice %107 {offsets = [0, 20], sizes = [2, 20], strides = [1, 1]} : vector<2x60xf32> to vector<2x20xf32>
    %112 = vector.extract_strided_slice %107 {offsets = [0, 40], sizes = [2, 20], strides = [1, 1]} : vector<2x60xf32> to vector<2x20xf32>
    %c2_75 = arith.constant 2 : index
    %c0_76 = arith.constant 0 : index
    %c0_77 = arith.constant 0 : index
    %113 = vector.load %arg2[%c2_75, %c0_76, %c0_77] : memref<4x2x20xf32, #tpu.memory_space<vmem>>, vector<1x2x20xf32>
    %114 = vector.shape_cast %113 : vector<1x2x20xf32> to vector<2x20xf32>
    %115 = arith.mulf %111, %114 : vector<2x20xf32>
    %116 = arith.mulf %110, %109 : vector<2x20xf32>
    %117 = arith.addf %115, %116 : vector<2x20xf32>
    %118 = math.tanh %117 : vector<2x20xf32>
    %119 = arith.mulf %112, %118 : vector<2x20xf32>
    %c2_78 = arith.constant 2 : index
    %c0_79 = arith.constant 0 : index
    %c0_80 = arith.constant 0 : index
    %120 = vector.load %arg14[%c2_78, %c0_79, %c0_80] : memref<4x2x20xf32, #tpu.memory_space<vmem>>, vector<1x2x20xf32>
    %121 = vector.shape_cast %120 : vector<1x2x20xf32> to vector<2x20xf32>
    %122 = vector.shape_cast %119 : vector<2x20xf32> to vector<1x2x20xf32>
    tpu.vector_store %arg14[%c2_78, %c0_79, %c0_80], %122 {strides = array<i32>} : memref<4x2x20xf32, #tpu.memory_space<vmem>>, vector<1x2x20xf32>,
    %c2_81 = arith.constant 2 : index
    %c0_82 = arith.constant 0 : index
    %c0_83 = arith.constant 0 : index
    %123 = vector.load %arg15[%c2_81, %c0_82, %c0_83] : memref<4x2x20xf32, #tpu.memory_space<vmem>>, vector<1x2x20xf32>
    %124 = vector.shape_cast %123 : vector<1x2x20xf32> to vector<2x20xf32>
    %125 = vector.shape_cast %117 : vector<2x20xf32> to vector<1x2x20xf32>
    tpu.vector_store %arg15[%c2_81, %c0_82, %c0_83], %125 {strides = array<i32>} : memref<4x2x20xf32, #tpu.memory_space<vmem>>, vector<1x2x20xf32>,
    %c2_84 = arith.constant 2 : index
    %c0_85 = arith.constant 0 : index
    %c0_86 = arith.constant 0 : index
    %126 = vector.load %arg4[%c2_84, %c0_85, %c0_86] : memref<3x20x80xf32, #tpu.memory_space<vmem>>, vector<1x20x80xf32>
    %127 = vector.shape_cast %126 : vector<1x20x80xf32> to vector<20x80xf32>
    %cst_87 = arith.constant dense<0.000000e+00> : vector<2x80xf32>
    %128 = tpu.matmul %119, %127, %cst_87 {dimension_numbers = #tpu.dot_dimension_numbers<[1], [0], [0], [1], [0, 0, 1, 1], [], []>} : vector<2x20xf32>, vector<20x80xf32>, vector<2x80xf32> -> vector<2x80xf32>
    %129 = arith.addf %128, %36 : vector<2x80xf32>
    %130 = vector.extract_strided_slice %129 {offsets = [0, 0], sizes = [2, 60], strides = [1, 1]} : vector<2x80xf32> to vector<2x60xf32>
    %cst_88 = arith.constant 5.000000e-01 : f32
    %131 = vector.broadcast %cst_88 : f32 to vector<2x60xf32>
    %132 = arith.mulf %131, %130 : vector<2x60xf32>
    %133 = math.tanh %132 : vector<2x60xf32>
    %cst_89 = arith.constant 5.000000e-01 : f32
    %134 = vector.broadcast %cst_89 : f32 to vector<2x60xf32>
    %135 = arith.mulf %134, %133 : vector<2x60xf32>
    %cst_90 = arith.constant 5.000000e-01 : f32
    %136 = vector.broadcast %cst_90 : f32 to vector<2x60xf32>
    %137 = arith.addf %135, %136 : vector<2x60xf32>
    %138 = vector.extract_strided_slice %129 {offsets = [0, 60], sizes = [2, 20], strides = [1, 1]} : vector<2x80xf32> to vector<2x20xf32>
    %139 = math.tanh %138 : vector<2x20xf32>
    %140 = vector.extract_strided_slice %137 {offsets = [0, 0], sizes = [2, 20], strides = [1, 1]} : vector<2x60xf32> to vector<2x20xf32>
    %141 = vector.extract_strided_slice %137 {offsets = [0, 20], sizes = [2, 20], strides = [1, 1]} : vector<2x60xf32> to vector<2x20xf32>
    %142 = vector.extract_strided_slice %137 {offsets = [0, 40], sizes = [2, 20], strides = [1, 1]} : vector<2x60xf32> to vector<2x20xf32>
    %c3_91 = arith.constant 3 : index
    %c0_92 = arith.constant 0 : index
    %c0_93 = arith.constant 0 : index
    %143 = vector.load %arg2[%c3_91, %c0_92, %c0_93] : memref<4x2x20xf32, #tpu.memory_space<vmem>>, vector<1x2x20xf32>
    %144 = vector.shape_cast %143 : vector<1x2x20xf32> to vector<2x20xf32>
    %145 = arith.mulf %141, %144 : vector<2x20xf32>
    %146 = arith.mulf %140, %139 : vector<2x20xf32>
    %147 = arith.addf %145, %146 : vector<2x20xf32>
    %148 = math.tanh %147 : vector<2x20xf32>
    %149 = arith.mulf %142, %148 : vector<2x20xf32>
    %c3_94 = arith.constant 3 : index
    %c0_95 = arith.constant 0 : index
    %c0_96 = arith.constant 0 : index
    %150 = vector.load %arg14[%c3_94, %c0_95, %c0_96] : memref<4x2x20xf32, #tpu.memory_space<vmem>>, vector<1x2x20xf32>
    %151 = vector.shape_cast %150 : vector<1x2x20xf32> to vector<2x20xf32>
    %152 = vector.shape_cast %149 : vector<2x20xf32> to vector<1x2x20xf32>
    tpu.vector_store %arg14[%c3_94, %c0_95, %c0_96], %152 {strides = array<i32>} : memref<4x2x20xf32, #tpu.memory_space<vmem>>, vector<1x2x20xf32>,
    %c3_97 = arith.constant 3 : index
    %c0_98 = arith.constant 0 : index
    %c0_99 = arith.constant 0 : index
    %153 = vector.load %arg15[%c3_97, %c0_98, %c0_99] : memref<4x2x20xf32, #tpu.memory_space<vmem>>, vector<1x2x20xf32>
    %154 = vector.shape_cast %153 : vector<1x2x20xf32> to vector<2x20xf32>
    %155 = vector.shape_cast %147 : vector<2x20xf32> to vector<1x2x20xf32>
    tpu.vector_store %arg15[%c3_97, %c0_98, %c0_99], %155 {strides = array<i32>} : memref<4x2x20xf32, #tpu.memory_space<vmem>>, vector<1x2x20xf32>,
    %c0_100 = arith.constant 0 : index
    %c0_101 = arith.constant 0 : index
    %156 = vector.load %arg7[%c0_100, %c0_101] : memref<20x32xf32, #tpu.memory_space<vmem>>, vector<20x32xf32>
    %cst_102 = arith.constant dense<0.000000e+00> : vector<2x32xf32>
    %157 = tpu.matmul %149, %156, %cst_102 {dimension_numbers = #tpu.dot_dimension_numbers<[1], [0], [0], [1], [0, 0, 1, 1], [], []>} : vector<2x20xf32>, vector<20x32xf32>, vector<2x32xf32> -> vector<2x32xf32>
    %c0_103 = arith.constant 0 : index
    %c0_104 = arith.constant 0 : index
    %158 = vector.load %arg8[%c0_103, %c0_104] : memref<1x32xf32, #tpu.memory_space<vmem>>, vector<1x32xf32>
    %159 = vector.broadcast %158 : vector<1x32xf32> to vector<2x32xf32>
    %160 = arith.addf %157, %159 : vector<2x32xf32>
    %cst_105 = arith.constant 0.000000e+00 : f32
    %161 = vector.broadcast %cst_105 : f32 to vector<2x32xf32>
    %162 = arith.maximumf %160, %161 : vector<2x32xf32>
    %c0_106 = arith.constant 0 : index
    %c0_107 = arith.constant 0 : index
    %163 = vector.load %arg9[%c0_106, %c0_107] : memref<32x32xf32, #tpu.memory_space<vmem>>, vector<32x32xf32>
    %cst_108 = arith.constant dense<0.000000e+00> : vector<2x32xf32>
    %164 = tpu.matmul %162, %163, %cst_108 {dimension_numbers = #tpu.dot_dimension_numbers<[1], [0], [0], [1], [0, 0, 1, 1], [], []>} : vector<2x32xf32>, vector<32x32xf32>, vector<2x32xf32> -> vector<2x32xf32>
    %c0_109 = arith.constant 0 : index
    %c0_110 = arith.constant 0 : index
    %165 = vector.load %arg10[%c0_109, %c0_110] : memref<1x32xf32, #tpu.memory_space<vmem>>, vector<1x32xf32>
    %166 = vector.broadcast %165 : vector<1x32xf32> to vector<2x32xf32>
    %167 = arith.addf %164, %166 : vector<2x32xf32>
    %cst_111 = arith.constant 0.000000e+00 : f32
    %168 = vector.broadcast %cst_111 : f32 to vector<2x32xf32>
    %169 = arith.maximumf %167, %168 : vector<2x32xf32>
    %c0_112 = arith.constant 0 : index
    %c0_113 = arith.constant 0 : index
    %170 = vector.load %arg11[%c0_112, %c0_113] : memref<32x5xf32, #tpu.memory_space<vmem>>, vector<32x5xf32>
    %cst_114 = arith.constant dense<0.000000e+00> : vector<2x5xf32>
    %171 = tpu.matmul %169, %170, %cst_114 {dimension_numbers = #tpu.dot_dimension_numbers<[1], [0], [0], [1], [0, 0, 1, 1], [], []>} : vector<2x32xf32>, vector<32x5xf32>, vector<2x5xf32> -> vector<2x5xf32>
    %c0_115 = arith.constant 0 : index
    %c0_116 = arith.constant 0 : index
    %172 = vector.load %arg12[%c0_115, %c0_116] : memref<1x5xf32, #tpu.memory_space<vmem>>, vector<1x5xf32>
    %173 = vector.broadcast %172 : vector<1x5xf32> to vector<2x5xf32>
    %174 = arith.addf %171, %173 : vector<2x5xf32>
    %175 = vector.extract_strided_slice %174 {offsets = [0, 0], sizes = [2, 1], strides = [1, 1]} : vector<2x5xf32> to vector<2x1xf32>
    %176 = vector.extract_strided_slice %174 {offsets = [0, 1], sizes = [2, 4], strides = [1, 1]} : vector<2x5xf32> to vector<2x4xf32>
    %177 = vector.broadcast %175 : vector<2x1xf32> to vector<2x4xf32>
    %178 = arith.addf %177, %176 : vector<2x4xf32>
    %179 = vector.shape_cast %176 : vector<2x4xf32> to vector<1x2x4xf32>
    %cst_117 = arith.constant dense<0.000000e+00> : vector<1xf32>
    %180 = vector.multi_reduction <add>, %179, %cst_117 [1, 2] : vector<1x2x4xf32> to vector<1xf32>
    %181 = vector.shape_cast %180 : vector<1xf32> to vector<1x1x1xf32>
    %182 = vector.extract %181[0, 0, 0] : f32 from vector<1x1x1xf32>
    %cst_118 = arith.constant 8.000000e+00 : f32
    %183 = arith.divf %182, %cst_118 : f32
    %184 = vector.broadcast %183 : f32 to vector<2x4xf32>
    %185 = arith.subf %178, %184 : vector<2x4xf32>
    %c0_119 = arith.constant 0 : index
    %c0_120 = arith.constant 0 : index
    %186 = vector.load %arg13[%c0_119, %c0_120] : memref<2x4xf32, #tpu.memory_space<vmem>>, vector<2x4xf32>
    tpu.vector_store %arg13[%c0_119, %c0_120], %185 {strides = array<i32>} : memref<2x4xf32, #tpu.memory_space<vmem>>, vector<2x4xf32>,
    return
  }
}

</mosaic_0001>

<llo_original>
// kernel: tpu_custom_call.1
$region0: #{tpu_custom_call.1}
  #allocation0 [shape = 'u32[]', space=smem, size = 0x4, offset = 0x4, fixed_abs, tag = 'smem constant byte address 0x4 - core index']
  #allocation1 [shape = 'u32[72,128]{1,0:T(1,128)}', space=vmem, size = 0x9000, scoped, tag = 'internal scratch']
  %s0 = inlined_call_operand.vmem [shape: f32[2,16], index: 0, kind: input, shape index: {}]
  %s1 = inlined_call_operand.vmem [shape: f32[4,2,20], index: 1, kind: input, shape index: {}]
  %s2 = inlined_call_operand.vmem [shape: f32[4,2,20], index: 2, kind: input, shape index: {}]
  %s3 = inlined_call_operand.vmem [shape: f32[16,80], index: 3, kind: input, shape index: {}]
  %s4 = inlined_call_operand.vmem [shape: f32[3,20,80], index: 4, kind: input, shape index: {}]
  %s5 = inlined_call_operand.vmem [shape: f32[4,20,80], index: 5, kind: input, shape index: {}]
  %s6 = inlined_call_operand.vmem [shape: f32[4,1,80], index: 6, kind: input, shape index: {}]
  %s7 = inlined_call_operand.vmem [shape: f32[20,32], index: 7, kind: input, shape index: {}]
  %s8 = inlined_call_operand.vmem [shape: f32[1,32], index: 8, kind: input, shape index: {}]
  %s9 = inlined_call_operand.vmem [shape: f32[32,32], index: 9, kind: input, shape index: {}]
  %s10 = inlined_call_operand.vmem [shape: f32[1,32], index: 10, kind: input, shape index: {}]
  %s11 = inlined_call_operand.vmem [shape: f32[32,5], index: 11, kind: input, shape index: {}]
  %s12 = inlined_call_operand.vmem [shape: f32[1,5], index: 12, kind: input, shape index: {}]
  %s13 = inlined_call_operand.hbm [shape: f32[2,4], index: 13, kind: output, shape index: {0}]
  %s14 = inlined_call_operand.hbm [shape: f32[4,2,20], index: 14, kind: output, shape index: {1}]
  %s15 = inlined_call_operand.hbm [shape: f32[4,2,20], index: 15, kind: output, shape index: {2}]
  %16 = xla_tuple %s13, %s14, %s15
  %s17 = sld [smem:[#allocation0]]
  $region78: #{tpu_custom_call.1} parent=0
    _
  %s19 = ssub.s32 1, %s17
  %s20 = scalar_select 0, %s19, %s17
  $region1: #{tpu_custom_call.1} parent=0
    #allocation2 [shape = 'u8[1024]{0}', space=vmem, size = 0x400, scoped, tag = 'output window, operand 0, single buffered']
    #allocation3 [shape = 's32[1]{0}', space=sflag, size = 0x4, scoped, tag = 'scoped memory for tpu_custom_call.1']
    #allocation4 [shape = 'u8[4096]{0}', space=vmem, size = 0x1000, scoped, tag = 'output window, operand 1, single buffered']
    #allocation5 [shape = 's32[1]{0}', space=sflag, size = 0x4, scoped, tag = 'scoped memory for tpu_custom_call.1']
    #allocation6 [shape = 'u8[4096]{0}', space=vmem, size = 0x1000, scoped, tag = 'output window, operand 2, single buffered']
    %21 = vsyncpa [#allocation3], 0
    %22 = vsyncpa [#allocation5], 0
    // Predicated region
    $region2: #{tpu_custom_call.1} parent=1 // pred_check
      _
    $region3: #{tpu_custom_call.1} parent=1 // pred_check_branch
      %24 = sbr.rel (0) target = $region5
    $region4: #{tpu_custom_call.1} parent=1 // pred_region
      _
    $region5: #{tpu_custom_call.1} parent=1 // pred_fallthru
      _
    // Predicated region
    $region6: #{tpu_custom_call.1} parent=1 // pred_check
      _
    $region7: #{tpu_custom_call.1} parent=1 // pred_check_branch
      %26 = sbr.rel (0) target = $region9
    $region8: #{tpu_custom_call.1} parent=1 // pred_region
      _
    $region9: #{tpu_custom_call.1} parent=1 // pred_fallthru
      _
    // Predicated region
    $region10: #{tpu_custom_call.1} parent=1 // pred_check
      _
    $region11: #{tpu_custom_call.1} parent=1 // pred_check_branch
      %28 = sbr.rel (0) target = $region13
    $region12: #{tpu_custom_call.1} parent=1 // pred_region
      _
    $region13: #{tpu_custom_call.1} parent=1 // pred_fallthru
      _
    // Predicated region
    $region14: #{tpu_custom_call.1} parent=1 // pred_check
      _
    $region15: #{tpu_custom_call.1} parent=1 // pred_check_branch
      %30 = sbr.rel (0) target = $region17
    $region16: #{tpu_custom_call.1} parent=1 // pred_region
      _
    $region17: #{tpu_custom_call.1} parent=1 // pred_fallthru
      _
    // Predicated region
    $region18: #{tpu_custom_call.1} parent=1 // pred_check
      _
    $region19: #{tpu_custom_call.1} parent=1 // pred_check_branch
      %32 = sbr.rel (0) target = $region21
    $region20: #{tpu_custom_call.1} parent=1 // pred_region
      _
    $region21: #{tpu_custom_call.1} parent=1 // pred_fallthru
      _
    // Predicated region
    $region22: #{tpu_custom_call.1} parent=1 // pred_check
      _
    $region23: #{tpu_custom_call.1} parent=1 // pred_check_branch
      %34 = sbr.rel (0) target = $region25
    $region24: #{tpu_custom_call.1} parent=1 // pred_region
      _
    $region25: #{tpu_custom_call.1} parent=1 // pred_fallthru
      _
    // Predicated region
    $region26: #{tpu_custom_call.1} parent=1 // pred_check
      _
    $region27: #{tpu_custom_call.1} parent=1 // pred_check_branch
      %36 = sbr.rel (0) target = $region29
    $region28: #{tpu_custom_call.1} parent=1 // pred_region
      _
    $region29: #{tpu_custom_call.1} parent=1 // pred_fallthru
      _
    // Predicated region
    $region30: #{tpu_custom_call.1} parent=1 // pred_check
      _
    $region31: #{tpu_custom_call.1} parent=1 // pred_check_branch
      %38 = sbr.rel (0) target = $region33
    $region32: #{tpu_custom_call.1} parent=1 // pred_region
      _
    $region33: #{tpu_custom_call.1} parent=1 // pred_fallthru
      _
    // Predicated region
    $region34: #{tpu_custom_call.1} parent=1 // pred_check
      _
    $region35: #{tpu_custom_call.1} parent=1 // pred_check_branch
      %40 = sbr.rel (0) target = $region37
    $region36: #{tpu_custom_call.1} parent=1 // pred_region
      _
    $region37: #{tpu_custom_call.1} parent=1 // pred_fallthru
      _
    // Predicated region
    $region38: #{tpu_custom_call.1} parent=1 // pred_check
      _
    $region39: #{tpu_custom_call.1} parent=1 // pred_check_branch
      %42 = sbr.rel (0) target = $region41
    $region40: #{tpu_custom_call.1} parent=1 // pred_region
      _
    $region41: #{tpu_custom_call.1} parent=1 // pred_fallthru
      _
    // Predicated region
    $region42: #{tpu_custom_call.1} parent=1 // pred_check
      _
    $region43: #{tpu_custom_call.1} parent=1 // pred_check_branch
      %44 = sbr.rel (0) target = $region45
    $region44: #{tpu_custom_call.1} parent=1 // pred_region
      _
    $region45: #{tpu_custom_call.1} parent=1 // pred_fallthru
      _
    // Predicated region
    $region46: #{tpu_custom_call.1} parent=1 // pred_check
      _
    $region47: #{tpu_custom_call.1} parent=1 // pred_check_branch
      %46 = sbr.rel (0) target = $region49
    $region48: #{tpu_custom_call.1} parent=1 // pred_region
      _
    $region49: #{tpu_custom_call.1} parent=1 // pred_fallthru
      _
    // Predicated region
    $region50: #{tpu_custom_call.1} parent=1 // pred_check
      _
    $region51: #{tpu_custom_call.1} parent=1 // pred_check_branch
      %48 = sbr.rel (0) target = $region53
    $region52: #{tpu_custom_call.1} parent=1 // pred_region
      _
    $region53: #{tpu_custom_call.1} parent=1 // pred_fallthru
      _
    %v49 = vld [vmem:[%s0] sm:$0x3]
    %v50 = vld [vmem:[%s1] sm:$0x3]
    %v51 = vld [vmem:[%s5] sm:$0xff]
    %v52 = vld [vmem:[%s5 + $0x8] sm:$0xff]
    %v53 = vld [vmem:[%s5 + $0x10] sm:$0xf]
    %v54 = vld [vmem:[%s6] sm:$0x1]
    %v56 = vperm.slane %v54, 0
    %vm58 = vcmask 162816
    %v60 = vsel %vm58, %v50, 0
    %vm62 = vcmask 1043456
    %v64 = vsel %vm62, %v53, 0
    %66 = vmatpush.msra.mxu0 0.0
    %67 = vmatpush.msra.mxu0 0.0
    %68 = vmatpush.msra.mxu0 0.0
    %69 = vmatpush.msra.mxu0 0.0
    %70 = vmatpush.msra.mxu0 0.0
    %71 = vmatpush.msra.mxu0 0.0
    %72 = vmatpush.msra.mxu0 0.0
    %73 = vmatpush.msra.mxu0 0.0
    %74 = vmatpush.msra.mxu0 0.0
    %75 = vmatpush.msra.mxu0 0.0
    %76 = vmatpush.msra.mxu0 0.0
    %77 = vmatpush.msra.mxu0 0.0
    %78 = vmatpush.msra.mxu0 0.0
    %79 = vmatpush.msra.mxu0 %v64
    %80 = vmatpush.msra.mxu0 %v52
    %81 = vmatpush.msra.mxu0 %v51
    %82 = vmatmul.f32.gmra.mxu0 %v60
    %v83 = vpop.f32.mrf.mxu0
    %v84 = vadd.f32 %v56, %v83
    %85 = vdwg.mxu0
    %s86 = scalar_lea.vmem %s1, 2
    %v87 = vld [vmem:[%s86] sm:$0x3]
    %s88 = scalar_lea.vmem %s5, 24
    %v89 = vld [vmem:[%s88] sm:$0xff]
    %v90 = vld [vmem:[%s88 + $0x8] sm:$0xff]
    %v91 = vld [vmem:[%s88 + $0x10] sm:$0xf]
    %s92 = scalar_lea.vmem %s6, 1
    %v93 = vld [vmem:[%s92] sm:$0x1]
    %v95 = vperm.slane %v93, 0
    %v98 = vsel %vm58, %v87, 0
    %v101 = vsel %vm62, %v91, 0
    %103 = vmatpush.msra.mxu0 0.0
    %104 = vmatpush.msra.mxu0 0.0
    %105 = vmatpush.msra.mxu0 0.0
    %106 = vmatpush.msra.mxu0 0.0
    %107 = vmatpush.msra.mxu0 0.0
    %108 = vmatpush.msra.mxu0 0.0
    %109 = vmatpush.msra.mxu0 0.0
    %110 = vmatpush.msra.mxu0 0.0
    %111 = vmatpush.msra.mxu0 0.0
    %112 = vmatpush.msra.mxu0 0.0
    %113 = vmatpush.msra.mxu0 0.0
    %114 = vmatpush.msra.mxu0 0.0
    %115 = vmatpush.msra.mxu0 0.0
    %116 = vmatpush.msra.mxu0 %v101
    %117 = vmatpush.msra.mxu0 %v90
    %118 = vmatpush.msra.mxu0 %v89
    %119 = vmatmul.f32.gmra.mxu0 %v98
    %v120 = vpop.f32.mrf.mxu0
    %v121 = vadd.f32 %v95, %v120
    %122 = vdwg.mxu0
    %s123 = scalar_lea.vmem %s1, 4
    %v124 = vld [vmem:[%s123] sm:$0x3]
    %s125 = scalar_lea.vmem %s5, 48
    %v126 = vld [vmem:[%s125] sm:$0xff]
    %v127 = vld [vmem:[%s125 + $0x8] sm:$0xff]
    %v128 = vld [vmem:[%s125 + $0x10] sm:$0xf]
    %s129 = scalar_lea.vmem %s6, 2
    %v130 = vld [vmem:[%s129] sm:$0x1]
    %v132 = vperm.slane %v130, 0
    %v135 = vsel %vm58, %v124, 0
    %v138 = vsel %vm62, %v128, 0
    %140 = vmatpush.msra.mxu0 0.0
    %141 = vmatpush.msra.mxu0 0.0
    %142 = vmatpush.msra.mxu0 0.0
    %143 = vmatpush.msra.mxu0 0.0
    %144 = vmatpush.msra.mxu0 0.0
    %145 = vmatpush.msra.mxu0 0.0
    %146 = vmatpush.msra.mxu0 0.0
    %147 = vmatpush.msra.mxu0 0.0
    %148 = vmatpush.msra.mxu0 0.0
    %149 = vmatpush.msra.mxu0 0.0
    %150 = vmatpush.msra.mxu0 0.0
    %151 = vmatpush.msra.mxu0 0.0
    %152 = vmatpush.msra.mxu0 0.0
    %153 = vmatpush.msra.mxu0 %v138
    %154 = vmatpush.msra.mxu0 %v127
    %155 = vmatpush.msra.mxu0 %v126
    %156 = vmatmul.f32.gmra.mxu0 %v135
    %v157 = vpop.f32.mrf.mxu0
    %v158 = vadd.f32 %v132, %v157
    %159 = vdwg.mxu0
    %s160 = scalar_lea.vmem %s1, 6
    %v161 = vld [vmem:[%s160] sm:$0x3]
    %s162 = scalar_lea.vmem %s5, 72
    %v163 = vld [vmem:[%s162] sm:$0xff]
    %v164 = vld [vmem:[%s162 + $0x8] sm:$0xff]
    %v165 = vld [vmem:[%s162 + $0x10] sm:$0xf]
    %s166 = scalar_lea.vmem %s6, 3
    %v167 = vld [vmem:[%s166] sm:$0x1]
    %v169 = vperm.slane %v167, 0
    %v172 = vsel %vm58, %v161, 0
    %v175 = vsel %vm62, %v165, 0
    %177 = vmatpush.msra.mxu0 0.0
    %178 = vmatpush.msra.mxu0 0.0
    %179 = vmatpush.msra.mxu0 0.0
    %180 = vmatpush.msra.mxu0 0.0
    %181 = vmatpush.msra.mxu0 0.0
    %182 = vmatpush.msra.mxu0 0.0
    %183 = vmatpush.msra.mxu0 0.0
    %184 = vmatpush.msra.mxu0 0.0
    %185 = vmatpush.msra.mxu0 0.0
    %186 = vmatpush.msra.mxu0 0.0
    %187 = vmatpush.msra.mxu0 0.0
    %188 = vmatpush.msra.mxu0 0.0
    %189 = vmatpush.msra.mxu0 0.0
    %190 = vmatpush.msra.mxu0 %v175
    %191 = vmatpush.msra.mxu0 %v164
    %192 = vmatpush.msra.mxu0 %v163
    %193 = vmatmul.f32.gmra.mxu0 %v172
    %v194 = vpop.f32.mrf.mxu0
    %v195 = vadd.f32 %v169, %v194
    %196 = vdwg.mxu0
    %v197 = vld [vmem:[%s3] sm:$0xff]
    %v198 = vld [vmem:[%s3 + $0x8] sm:$0xff]
    %vm199 = vcmask 130048
    %v201 = vsel %vm199, %v49, 0
    %203 = vmatpush.msra.mxu0 0.0
    %204 = vmatpush.msra.mxu0 0.0
    %205 = vmatpush.msra.mxu0 0.0
    %206 = vmatpush.msra.mxu0 0.0
    %207 = vmatpush.msra.mxu0 0.0
    %208 = vmatpush.msra.mxu0 0.0
    %209 = vmatpush.msra.mxu0 0.0
    %210 = vmatpush.msra.mxu0 0.0
    %211 = vmatpush.msra.mxu0 0.0
    %212 = vmatpush.msra.mxu0 0.0
    %213 = vmatpush.msra.mxu0 0.0
    %214 = vmatpush.msra.mxu0 0.0
    %215 = vmatpush.msra.mxu0 0.0
    %216 = vmatpush.msra.mxu0 0.0
    %217 = vmatpush.msra.mxu0 %v198
    %218 = vmatpush.msra.mxu0 %v197
    %219 = vmatmul.f32.gmra.mxu0 %v201
    %v220 = vpop.f32.mrf.mxu0
    %v221 = vadd.f32 %v84, %v220
    %222 = vdwg.mxu0
    %v223 = vmul.f32 %v221, 0.5
    %v224 = vtanh.pop %v223
    %v225 = vmul.f32 %v224, 0.5
    %v226 = vadd.f32 %v225, 0.5
    %v227 = vtanh.pop %v221
    %v228 = vld [vmem:[%s2] sm:$0x3]
    %230 = vrot.lane.b32.xlu0 %v228, 20
    %v231 = vpop.permute.xlu0 %230
    %v233 = vmul.f32 %v226, %v231
    %235 = vrot.lane.b32.xlu0 %v227, 68
    %v236 = vpop.permute.xlu0 %235
    %v238 = vmul.f32 %v226, %v236
    %240 = vrot.lane.b32.xlu0 %v238, 20
    %v241 = vpop.permute.xlu0 %240
    %v243 = vadd.f32 %v233, %v241
    %v244 = vtanh.pop %v243
    %246 = vrot.lane.b32.xlu0 %v244, 20
    %v247 = vpop.permute.xlu0 %246
    %v249 = vmul.f32 %v226, %v247
    %251 = vrot.lane.b32.xlu0 %v249, 88
    %v252 = vpop.permute.xlu0 %251
    %vm254 = vcmask 156672
    %255 = vst.msk [vmem:[#allocation4] sm:$0x3] %vm254, %v252
    %257 = vrot.lane.b32.xlu0 %v243, 108
    %v258 = vpop.permute.xlu0 %257
    %260 = vst.msk [vmem:[#allocation6] sm:$0x3] %vm254, %v258
    %v261 = vld [vmem:[%s4] sm:$0xff]
    %v262 = vld [vmem:[%s4 + $0x8] sm:$0xff]
    %v263 = vld [vmem:[%s4 + $0x10] sm:$0xf]
    %v264 = vsel %vm58, %v252, 0
    %v267 = vsel %vm62, %v263, 0
    %269 = vmatpush.msra.mxu0 0.0
    %270 = vmatpush.msra.mxu0 0.0
    %271 = vmatpush.msra.mxu0 0.0
    %272 = vmatpush.msra.mxu0 0.0
    %273 = vmatpush.msra.mxu0 0.0
    %274 = vmatpush.msra.mxu0 0.0
    %275 = vmatpush.msra.mxu0 0.0
    %276 = vmatpush.msra.mxu0 0.0
    %277 = vmatpush.msra.mxu0 0.0
    %278 = vmatpush.msra.mxu0 0.0
    %279 = vmatpush.msra.mxu0 0.0
    %280 = vmatpush.msra.mxu0 0.0
    %281 = vmatpush.msra.mxu0 0.0
    %282 = vmatpush.msra.mxu0 %v267
    %283 = vmatpush.msra.mxu0 %v262
    %284 = vmatpush.msra.mxu0 %v261
    %285 = vmatmul.f32.gmra.mxu0 %v264
    %v286 = vpop.f32.mrf.mxu0
    %v287 = vadd.f32 %v121, %v286
    %288 = vdwg.mxu0
    %v289 = vmul.f32 %v287, 0.5
    %v290 = vtanh.pop %v289
    %v291 = vmul.f32 %v290, 0.5
    %v292 = vadd.f32 %v291, 0.5
    %v293 = vtanh.pop %v287
    %s294 = scalar_lea.vmem %s2, 2
    %v295 = vld [vmem:[%s294] sm:$0x3]
    %297 = vrot.lane.b32.xlu0 %v295, 20
    %v298 = vpop.permute.xlu0 %297
    %v300 = vmul.f32 %v292, %v298
    %302 = vrot.lane.b32.xlu0 %v293, 68
    %v303 = vpop.permute.xlu0 %302
    %v305 = vmul.f32 %v292, %v303
    %307 = vrot.lane.b32.xlu0 %v305, 20
    %v308 = vpop.permute.xlu0 %307
    %v310 = vadd.f32 %v300, %v308
    %v311 = vtanh.pop %v310
    %313 = vrot.lane.b32.xlu0 %v311, 20
    %v314 = vpop.permute.xlu0 %313
    %v316 = vmul.f32 %v292, %v314
    %318 = vrot.lane.b32.xlu0 %v316, 88
    %v319 = vpop.permute.xlu0 %318
    %s321 = scalar_lea.vmem [#allocation4], 2
    %322 = vst.msk [vmem:[%s321] sm:$0x3] %vm254, %v319
    %324 = vrot.lane.b32.xlu0 %v310, 108
    %v325 = vpop.permute.xlu0 %324
    %s327 = scalar_lea.vmem [#allocation6], 2
    %328 = vst.msk [vmem:[%s327] sm:$0x3] %vm254, %v325
    %s329 = scalar_lea.vmem %s4, 24
    %v330 = vld [vmem:[%s329] sm:$0xff]
    %v331 = vld [vmem:[%s329 + $0x8] sm:$0xff]
    %v332 = vld [vmem:[%s329 + $0x10] sm:$0xf]
    %v333 = vsel %vm58, %v319, 0
    %v336 = vsel %vm62, %v332, 0
    %338 = vmatpush.msra.mxu0 0.0
    %339 = vmatpush.msra.mxu0 0.0
    %340 = vmatpush.msra.mxu0 0.0
    %341 = vmatpush.msra.mxu0 0.0
    %342 = vmatpush.msra.mxu0 0.0
    %343 = vmatpush.msra.mxu0 0.0
    %344 = vmatpush.msra.mxu0 0.0
    %345 = vmatpush.msra.mxu0 0.0
    %346 = vmatpush.msra.mxu0 0.0
    %347 = vmatpush.msra.mxu0 0.0
    %348 = vmatpush.msra.mxu0 0.0
    %349 = vmatpush.msra.mxu0 0.0
    %350 = vmatpush.msra.mxu0 0.0
    %351 = vmatpush.msra.mxu0 %v336
    %352 = vmatpush.msra.mxu0 %v331
    %353 = vmatpush.msra.mxu0 %v330
    %354 = vmatmul.f32.gmra.mxu0 %v333
    %v355 = vpop.f32.mrf.mxu0
    %v356 = vadd.f32 %v158, %v355
    %357 = vdwg.mxu0
    %v358 = vmul.f32 %v356, 0.5
    %v359 = vtanh.pop %v358
    %v360 = vmul.f32 %v359, 0.5
    %v361 = vadd.f32 %v360, 0.5
    %v362 = vtanh.pop %v356
    %s363 = scalar_lea.vmem %s2, 4
    %v364 = vld [vmem:[%s363] sm:$0x3]
    %366 = vrot.lane.b32.xlu0 %v364, 20
    %v367 = vpop.permute.xlu0 %366
    %v369 = vmul.f32 %v361, %v367
    %371 = vrot.lane.b32.xlu0 %v362, 68
    %v372 = vpop.permute.xlu0 %371
    %v374 = vmul.f32 %v361, %v372
    %376 = vrot.lane.b32.xlu0 %v374, 20
    %v377 = vpop.permute.xlu0 %376
    %v379 = vadd.f32 %v369, %v377
    %v380 = vtanh.pop %v379
    %382 = vrot.lane.b32.xlu0 %v380, 20
    %v383 = vpop.permute.xlu0 %382
    %v385 = vmul.f32 %v361, %v383
    %387 = vrot.lane.b32.xlu0 %v385, 88
    %v388 = vpop.permute.xlu0 %387
    %s390 = scalar_lea.vmem [#allocation4], 4
    %391 = vst.msk [vmem:[%s390] sm:$0x3] %vm254, %v388
    %393 = vrot.lane.b32.xlu0 %v379, 108
    %v394 = vpop.permute.xlu0 %393
    %s396 = scalar_lea.vmem [#allocation6], 4
    %397 = vst.msk [vmem:[%s396] sm:$0x3] %vm254, %v394
    %s398 = scalar_lea.vmem %s4, 48
    %v399 = vld [vmem:[%s398] sm:$0xff]
    %v400 = vld [vmem:[%s398 + $0x8] sm:$0xff]
    %v401 = vld [vmem:[%s398 + $0x10] sm:$0xf]
    %v402 = vsel %vm58, %v388, 0
    %v405 = vsel %vm62, %v401, 0
    %407 = vmatpush.msra.mxu0 0.0
    %408 = vmatpush.msra.mxu0 0.0
    %409 = vmatpush.msra.mxu0 0.0
    %410 = vmatpush.msra.mxu0 0.0
    %411 = vmatpush.msra.mxu0 0.0
    %412 = vmatpush.msra.mxu0 0.0
    %413 = vmatpush.msra.mxu0 0.0
    %414 = vmatpush.msra.mxu0 0.0
    %415 = vmatpush.msra.mxu0 0.0
    %416 = vmatpush.msra.mxu0 0.0
    %417 = vmatpush.msra.mxu0 0.0
    %418 = vmatpush.msra.mxu0 0.0
    %419 = vmatpush.msra.mxu0 0.0
    %420 = vmatpush.msra.mxu0 %v405
    %421 = vmatpush.msra.mxu0 %v400
    %422 = vmatpush.msra.mxu0 %v399
    %423 = vmatmul.f32.gmra.mxu0 %v402
    %v424 = vpop.f32.mrf.mxu0
    %v425 = vadd.f32 %v195, %v424
    %426 = vdwg.mxu0
    %v427 = vmul.f32 %v425, 0.5
    %v428 = vtanh.pop %v427
    %v429 = vmul.f32 %v428, 0.5
    %v430 = vadd.f32 %v429, 0.5
    %v431 = vtanh.pop %v425
    %s432 = scalar_lea.vmem %s2, 6
    %v433 = vld [vmem:[%s432] sm:$0x3]
    %435 = vrot.lane.b32.xlu0 %v433, 20
    %v436 = vpop.permute.xlu0 %435
    %v438 = vmul.f32 %v430, %v436
    %440 = vrot.lane.b32.xlu0 %v431, 68
    %v441 = vpop.permute.xlu0 %440
    %v443 = vmul.f32 %v430, %v441
    %445 = vrot.lane.b32.xlu0 %v443, 20
    %v446 = vpop.permute.xlu0 %445
    %v448 = vadd.f32 %v438, %v446
    %v449 = vtanh.pop %v448
    %451 = vrot.lane.b32.xlu0 %v449, 20
    %v452 = vpop.permute.xlu0 %451
    %v454 = vmul.f32 %v430, %v452
    %456 = vrot.lane.b32.xlu0 %v454, 88
    %v457 = vpop.permute.xlu0 %456
    %s459 = scalar_lea.vmem [#allocation4], 6
    %460 = vst.msk [vmem:[%s459] sm:$0x3] %vm254, %v457
    %462 = vrot.lane.b32.xlu0 %v448, 108
    %v463 = vpop.permute.xlu0 %462
    %s465 = scalar_lea.vmem [#allocation6], 6
    %466 = vst.msk [vmem:[%s465] sm:$0x3] %vm254, %v463
    %v467 = vld [vmem:[%s7] sm:$0xff]
    %v468 = vld [vmem:[%s7 + $0x8] sm:$0xff]
    %v469 = vld [vmem:[%s7 + $0x10] sm:$0xf]
    %v470 = vld [vmem:[%s8] sm:$0x1]
    %v472 = vperm.slane %v470, 0
    %v474 = vsel %vm58, %v457, 0
    %v477 = vsel %vm62, %v469, 0
    %479 = vmatpush.msra.mxu0 0.0
    %480 = vmatpush.msra.mxu0 0.0
    %481 = vmatpush.msra.mxu0 0.0
    %482 = vmatpush.msra.mxu0 0.0
    %483 = vmatpush.msra.mxu0 0.0
    %484 = vmatpush.msra.mxu0 0.0
    %485 = vmatpush.msra.mxu0 0.0
    %486 = vmatpush.msra.mxu0 0.0
    %487 = vmatpush.msra.mxu0 0.0
    %488 = vmatpush.msra.mxu0 0.0
    %489 = vmatpush.msra.mxu0 0.0
    %490 = vmatpush.msra.mxu0 0.0
    %491 = vmatpush.msra.mxu0 0.0
    %492 = vmatpush.msra.mxu0 %v477
    %493 = vmatpush.msra.mxu0 %v468
    %494 = vmatpush.msra.mxu0 %v467
    %495 = vmatmul.f32.gmra.mxu0 %v474
    %v496 = vpop.f32.mrf.mxu0
    %v497 = vadd.f32 %v472, %v496
    %498 = vdwg.mxu0
    %v499 = vmax.f32 %v497, 0.0
    %v500 = vld [vmem:[%s9] sm:$0xff]
    %v501 = vld [vmem:[%s9 + $0x8] sm:$0xff]
    %v502 = vld [vmem:[%s9 + $0x10] sm:$0xff]
    %v503 = vld [vmem:[%s9 + $0x18] sm:$0xff]
    %v504 = vld [vmem:[%s10] sm:$0x1]
    %v506 = vperm.slane %v504, 0
    %vm508 = vcmask 261120
    %v510 = vsel %vm508, %v499, 0
    %512 = vmatpush.msra.mxu0 0.0
    %513 = vmatpush.msra.mxu0 0.0
    %514 = vmatpush.msra.mxu0 0.0
    %515 = vmatpush.msra.mxu0 0.0
    %516 = vmatpush.msra.mxu0 0.0
    %517 = vmatpush.msra.mxu0 0.0
    %518 = vmatpush.msra.mxu0 0.0
    %519 = vmatpush.msra.mxu0 0.0
    %520 = vmatpush.msra.mxu0 0.0
    %521 = vmatpush.msra.mxu0 0.0
    %522 = vmatpush.msra.mxu0 0.0
    %523 = vmatpush.msra.mxu0 0.0
    %524 = vmatpush.msra.mxu0 %v503
    %525 = vmatpush.msra.mxu0 %v502
    %526 = vmatpush.msra.mxu0 %v501
    %527 = vmatpush.msra.mxu0 %v500
    %528 = vmatmul.f32.gmra.mxu0 %v510
    %v529 = vpop.f32.mrf.mxu0
    %v530 = vadd.f32 %v506, %v529
    %531 = vdwg.mxu0
    %v532 = vmax.f32 %v530, 0.0
    %v533 = vld [vmem:[%s11] sm:$0xff]
    %v534 = vld [vmem:[%s11 + $0x8] sm:$0xff]
    %v535 = vld [vmem:[%s11 + $0x10] sm:$0xff]
    %v536 = vld [vmem:[%s11 + $0x18] sm:$0xff]
    %v537 = vld [vmem:[%s12] sm:$0x1]
    %v539 = vperm.slane %v537, 0
    %v542 = vsel %vm508, %v532, 0
    %544 = vmatpush.msra.mxu0 0.0
    %545 = vmatpush.msra.mxu0 0.0
    %546 = vmatpush.msra.mxu0 0.0
    %547 = vmatpush.msra.mxu0 0.0
    %548 = vmatpush.msra.mxu0 0.0
    %549 = vmatpush.msra.mxu0 0.0
    %550 = vmatpush.msra.mxu0 0.0
    %551 = vmatpush.msra.mxu0 0.0
    %552 = vmatpush.msra.mxu0 0.0
    %553 = vmatpush.msra.mxu0 0.0
    %554 = vmatpush.msra.mxu0 0.0
    %555 = vmatpush.msra.mxu0 0.0
    %556 = vmatpush.msra.mxu0 %v536
    %557 = vmatpush.msra.mxu0 %v535
    %558 = vmatpush.msra.mxu0 %v534
    %559 = vmatpush.msra.mxu0 %v533
    %560 = vmatmul.f32.gmra.mxu0 %v542
    %v561 = vpop.f32.mrf.mxu0
    %v562 = vadd.f32 %v539, %v561
    %563 = vdwg.mxu0
    %565 = vset.pattern.permute.xlu0 0
    %566 = vperm.xlu0 %565, %v562
    %v567 = vpop.permute.xlu0 %566
    %v569 = vadd.f32 %v567, %v562
    %570 = vrot.lane.b32.xlu0 %v562, 127
    %v571 = vpop.permute.xlu0 %570
    %vm573 = vcmask 25600
    %v574 = vsel %vm573, %v571, 0.0
    %575 = vadd.xlane.f32.xlu0 %v574
    %v576 = vpop.xlane.xlu0 %575
    %v577 = vrot.slane %v576, 4
    %v578 = vadd.f32 %v576, %v577
    %v579 = vrot.slane %v578, 2
    %v580 = vadd.f32 %v578, %v579
    %v581 = vrot.slane %v580, 1
    %v582 = vadd.f32 %v580, %v581
    %s583 = vtos %v582
    %v584 = vrcp.pop 8.0
    %v585 = vmul.f32 8.0, %v584
    %v586 = vsub.f32 1.0, %v585
    %v587 = vmul.f32 %v584, %v586
    %v588 = vadd.f32 %v584, %v587
    %vm589 = vweird.f32 %v584
    %v590 = vsel %vm589, %v584, %v588
    %s591 = vtos %v590
    %s592 = smul.f32 %s583, %s591
    %v593 = vstv %s592
    %v594 = vsub.f32 %v569, %v593
    %596 = vrot.lane.b32.xlu0 %v594, 127
    %v597 = vpop.permute.xlu0 %596
    %599 = vst.msk [vmem:[#allocation2] sm:$0x3] %vm573, %v597
    // Predicated region
    $region54: #{tpu_custom_call.1} parent=1 // pred_check
      _
    $region55: #{tpu_custom_call.1} parent=1 // pred_check_branch
      %601 = sbr.rel (0) target = $region57
    $region56: #{tpu_custom_call.1} parent=1 // pred_region
      %603 = vsyncadd [#allocation3], 0
      %s605 = sshll.u32 [#allocation2], 4
      %s606 = int_to_ptr.vmem [resolvable:$true] %s605
      %s607 = sshll.u32 %s13, 4
      %s608 = int_to_ptr.hbm [resolvable:$true] %s607
      %610 = dma.vmem_to_hbm [thread:$0]  %s606, 32, %s608, [#allocation3]
    $region57: #{tpu_custom_call.1} parent=1 // pred_fallthru
      _
    // Predicated region
    $region58: #{tpu_custom_call.1} parent=1 // pred_check
      _
    $region59: #{tpu_custom_call.1} parent=1 // pred_check_branch
      %612 = sbr.rel (0) target = $region61
    $region60: #{tpu_custom_call.1} parent=1 // pred_region
      %614 = vsyncadd [#allocation5], 0
      %s615 = sshll.u32 [#allocation4], 4
      %s616 = int_to_ptr.vmem [resolvable:$true] %s615
      %s617 = sshll.u32 %s14, 4
      %s618 = int_to_ptr.hbm [resolvable:$true] %s617
      %623 = dma.vmem_to_hbm [thread:$0]  %s616, 128, %s618, [#allocation5], 32, 32, 2
    $region61: #{tpu_custom_call.1} parent=1 // pred_fallthru
      _
    // Predicated region
    $region62: #{tpu_custom_call.1} parent=1 // pred_check
      _
    $region63: #{tpu_custom_call.1} parent=1 // pred_check_branch
      %625 = sbr.rel (0) target = $region65
    $region64: #{tpu_custom_call.1} parent=1 // pred_region
      %627 = vsyncadd [#allocation5], 0
      %s628 = sshll.u32 [#allocation6], 4
      %s629 = int_to_ptr.vmem [resolvable:$true] %s628
      %s630 = sshll.u32 %s15, 4
      %s631 = int_to_ptr.hbm [resolvable:$true] %s630
      %636 = dma.vmem_to_hbm [thread:$0]  %s629, 128, %s631, [#allocation5], 32, 32, 2
    $region65: #{tpu_custom_call.1} parent=1 // pred_fallthru
      _
    // Predicated region
    $region66: #{tpu_custom_call.1} parent=1 // pred_check
      _
    $region67: #{tpu_custom_call.1} parent=1 // pred_check_branch
      %638 = sbr.rel (0) target = $region69
    $region68: #{tpu_custom_call.1} parent=1 // pred_region
      %640 = dma.done [#allocation3], 32
    $region69: #{tpu_custom_call.1} parent=1 // pred_fallthru
      _
    // Predicated region
    $region70: #{tpu_custom_call.1} parent=1 // pred_check
      _
    $region71: #{tpu_custom_call.1} parent=1 // pred_check_branch
      %642 = sbr.rel (0) target = $region73
    $region72: #{tpu_custom_call.1} parent=1 // pred_region
      %644 = dma.done [#allocation5], 128
    $region73: #{tpu_custom_call.1} parent=1 // pred_fallthru
      _
    // Predicated region
    $region74: #{tpu_custom_call.1} parent=1 // pred_check
      _
    $region75: #{tpu_custom_call.1} parent=1 // pred_check_branch
      %646 = sbr.rel (0) target = $region77
    $region76: #{tpu_custom_call.1} parent=1 // pred_region
      %648 = dma.done [#allocation5], 128
    $region77: #{tpu_custom_call.1} parent=1 // pred_fallthru
      _
    %649 = vsyncpa [#allocation3], 1
    %650 = vsyncpa [#allocation5], 1

</llo_original>
